<compile_context>
chip_gen: v7x
topology: tpu7x:2x2x1
jax: 0.10.0
libtpu: 0.0.40
codegen_flags: <defaults>
</compile_context>

<pallas_src>
import numpy as np
import jax
import jax.numpy as jnp
from jax import lax
from jax.experimental import pallas as pl
from jax.experimental.pallas import tpu as pltpu


def _ceil_to(a, m):
    return ((a + m - 1) // m) * m


def _make_down_block_kernel(shifts, BP, W, Cout, C2p):
    """shifts: 9 flattened-lane tap offsets (dy-1)*W + (dx-1), tap-major order."""

    def kernel(x_ref, m_ref, w1_ref, b1_ref, w2_ref, b2_ref, sel_ref,
               pool_ref, skip_ref):
        # x_ref   : (1, Cin_p, BP)   B images side-by-side on the lane axis
        # m_ref   : (9, BP)          per-tap validity masks (0/1)
        # w1_ref  : (Cout, 9*Cin_p)  BN-scale-folded im2col weights (tap-major)
        # w2_ref  : (Cout, 9*C2p)
        # b?_ref  : (Cout, 1)        folded BN bias
        # sel_ref : (BP, BQ)         block-diagonal one-hot pool decimation
        # pool_ref: (1, Cout, BQ)    skip_ref: (1, Cout, BP)
        masks = m_ref[...]                                        # (9, BP)

        def conv3x3(a, w):                                        # a: (C, BP), C % 8 == 0
            cols = []
            for t, s in enumerate(shifts):
                if s == 0:
                    # Center tap: no shift; its mask is all ones -> skip multiply.
                    cols.append(a)
                else:
                    v = pltpu.roll(a, (-s) % BP, axis=1)          # out[:, p] = a[:, p + s]
                    cols.append(v * masks[t:t + 1, :])            # zero pad / cross-image lanes
            patches = jnp.concatenate(cols, axis=0)               # (9*C, BP), 8-row aligned
            return jnp.dot(w, patches, preferred_element_type=jnp.float32)

        x = x_ref[0]                                              # (Cin_p, BP)
        h1 = jnp.maximum(conv3x3(x, w1_ref[...]) + b1_ref[...], 0.0)       # (Cout, BP)
        if C2p != Cout:                                           # sublane-align conv2 input
            h1 = jnp.concatenate(
                [h1, jnp.zeros((C2p - Cout, h1.shape[1]), h1.dtype)], axis=0)
        h2 = jnp.maximum(conv3x3(h1, w2_ref[...]) + b2_ref[...], 0.0)      # (Cout, BP)

        # Skip connection: one dense (Cout, B*P) store.
        skip_ref[0] = h2.astype(skip_ref.dtype)

        # MaxPool2d(2,2): pairwise max with the right / lower neighbour via XLU
        # rolls, then one exact one-hot decimation matmul picking the window
        # anchor column 2*ph*W + 2*pw of every image (wrapped / cross-image
        # lanes are never selected because H and W are even).
        hmax = jnp.maximum(h2, pltpu.roll(h2, BP - 1, axis=1))    # max(p, p+1)
        vmax = jnp.maximum(hmax, pltpu.roll(hmax, BP - W, axis=1))  # 2x2 window max
        pooled = jnp.dot(vmax, sel_ref[...], preferred_element_type=jnp.float32)
        pool_ref[0] = pooled.astype(pool_ref.dtype)               # dense (Cout, B*Q) store

    return kernel


def down_conv_with_maxpool(x_nchw, p, *, eps=1e-5, images_per_step=None):
    """Pallas implementation of DownConvWithMaxPool2DBlock.forward (eval mode)."""
    N, Cin, H, W = x_nchw.shape
    Cout = p["w1"].shape[0]
    assert H % 2 == 0 and W % 2 == 0
    P = H * W
    Hp, Wp = H // 2, W // 2
    Q = Hp * Wp

    # Images per grid step: smallest divisor of N that makes the pooled store
    # lane-dense (B*Q >= 128); falls back to N (grid collapses to one step).
    # On v7x at scale, prefer keeping N // B >= 2 so both TensorCores get work.
    if images_per_step is None:
        images_per_step = N
        for cand in range(1, N + 1):
            if N % cand == 0 and cand * Q >= 128:
                images_per_step = cand
                break
    B = images_per_step
    assert N % B == 0
    G = N // B
    BP, BQ = B * P, B * Q

    Cin_p = _ceil_to(Cin, 8)      # 8-row-aligned im2col chunks for conv1
    C2p = _ceil_to(Cout, 8)       # ... and conv2

    # --- input layout plumbing (tiny XLA ops): pad channels with zeros, put B
    #     images side-by-side on the lane axis -> (G, Cin_p, B*P).
    xf = x_nchw.astype(jnp.float32)
    if Cin_p != Cin:
        xf = jnp.pad(xf, ((0, 0), (0, Cin_p - Cin), (0, 0), (0, 0)))
    x3 = (xf.reshape(G, B, Cin_p, P)
            .transpose(0, 2, 1, 3)
            .reshape(G, Cin_p, BP))

    # --- tap shifts + validity masks (compile-time consts).
    # NOTE: the shift-and-mask im2col (and sharing one lane axis across B
    # images) is correct because the mask zeros every lane whose source pixel
    # falls outside [0,H)x[0,W); this holds for 3x3 / pad=1 / stride=1 /
    # dilation=1 only.
    shifts = []
    mask1 = np.zeros((9, P), np.float32)
    hh, ww = np.divmod(np.arange(P), W)
    for dy in range(3):
        for dx in range(3):
            t = dy * 3 + dx
            shifts.append((dy - 1) * W + (dx - 1))
            valid = ((hh + dy - 1 >= 0) & (hh + dy - 1 < H) &
                     (ww + dx - 1 >= 0) & (ww + dx - 1 < W))
            mask1[t] = valid.astype(np.float32)
    masks = np.tile(mask1, (1, B))                                 # (9, B*P)

    # --- block-diagonal one-hot decimation selector for the 2x2/stride-2 pool.
    sel = np.zeros((BP, BQ), np.float32)
    q = np.arange(Q)
    ph, pw = np.divmod(q, Wp)
    src = (2 * ph) * W + (2 * pw)
    for b in range(B):
        sel[b * P + src, b * Q + q] = 1.0

    # --- fold eval-mode BatchNorm: per-channel scale into the conv weights,
    #     per-channel bias kept as a (Cout, 1) add in the kernel.
    inv1 = p["gamma1"] / jnp.sqrt(p["var1"] + eps)
    inv2 = p["gamma2"] / jnp.sqrt(p["var2"] + eps)
    b1 = (p["beta1"] - p["mean1"] * inv1).reshape(Cout, 1).astype(jnp.float32)
    b2 = (p["beta2"] - p["mean2"] * inv2).reshape(Cout, 1).astype(jnp.float32)

    def im2col_weights(w, c_in, c_pad, scale):
        # OIHW -> (Cout, 9, Cin) tap-major / channel-minor, zero-pad channels,
        # fold the BN scale per output row.
        w = jnp.transpose(w, (0, 2, 3, 1)).reshape(Cout, 9, c_in)
        if c_pad != c_in:
            w = jnp.pad(w, ((0, 0), (0, 0), (0, c_pad - c_in)))
        return (w.reshape(Cout, 9 * c_pad) * scale.reshape(Cout, 1)).astype(jnp.float32)

    w1m = im2col_weights(p["w1"], Cin, Cin_p, inv1)
    w2m = im2col_weights(p["w2"], Cout, C2p, inv2)

    grid_spec = pltpu.PrefetchScalarGridSpec(
        num_scalar_prefetch=0,
        grid=(G,),
        in_specs=[
            pl.BlockSpec((1, Cin_p, BP), lambda g: (g, 0, 0)),     # x slab
            pl.BlockSpec((9, BP), lambda g: (0, 0)),               # tap masks (grid-invariant)
            pl.BlockSpec((Cout, 9 * Cin_p), lambda g: (0, 0)),     # w1 (scale-folded)
            pl.BlockSpec((Cout, 1), lambda g: (0, 0)),             # b1
            pl.BlockSpec((Cout, 9 * C2p), lambda g: (0, 0)),       # w2 (scale-folded)
            pl.BlockSpec((Cout, 1), lambda g: (0, 0)),             # b2
            pl.BlockSpec((BP, BQ), lambda g: (0, 0)),              # pool decimation selector
        ],
        out_specs=[
            pl.BlockSpec((1, Cout, BQ), lambda g: (g, 0, 0)),      # pooled (lane-dense)
            pl.BlockSpec((1, Cout, BP), lambda g: (g, 0, 0)),      # skip
        ],
    )

    flops = G * 2 * Cout * BP * (9 * Cin_p + 9 * C2p + BQ)
    bytes_accessed = int(4 * (x3.size + masks.size + w1m.size + w2m.size +
                              b1.size + b2.size + sel.size +
                              G * Cout * (BP + BQ)))

    pool_g, skip_g = pl.pallas_call(
        _make_down_block_kernel(tuple(shifts), BP, W, Cout, C2p),
        out_shape=(jax.ShapeDtypeStruct((G, Cout, BQ), jnp.float32),
                   jax.ShapeDtypeStruct((G, Cout, BP), jnp.float32)),
        grid_spec=grid_spec,
        compiler_params=pltpu.CompilerParams(dimension_semantics=("parallel",)),
        cost_estimate=pl.CostEstimate(flops=flops, transcendentals=0,
                                      bytes_accessed=bytes_accessed),
    )(x3, jnp.asarray(masks), w1m, b1, w2m, b2, jnp.asarray(sel))

    # --- output layout plumbing: de-interleave images from the lane axis.
    pool = (pool_g.reshape(G, Cout, B, Q).transpose(0, 2, 1, 3)
                  .reshape(N, Cout, Hp, Wp))
    skip = (skip_g.reshape(G, Cout, B, P).transpose(0, 2, 1, 3)
                  .reshape(N, Cout, H, W))
    return pool, skip


def _reference(x, p, eps=1e-5):
    """Pure-JAX (XLA) reference of the same forward pass, NCHW."""
    def bn(y, g, b, m, v):
        def ex(a):
            return a[None, :, None, None]
        return (y - ex(m)) / jnp.sqrt(ex(v) + eps) * ex(g) + ex(b)

    y = lax.conv_general_dilated(x, p["w1"], (1, 1), "SAME",
                                 dimension_numbers=("NCHW", "OIHW", "NCHW"))
    y = jnp.maximum(bn(y, p["gamma1"], p["beta1"], p["mean1"], p["var1"]), 0.0)
    y = lax.conv_general_dilated(y, p["w2"], (1, 1), "SAME",
                                 dimension_numbers=("NCHW", "OIHW", "NCHW"))
    y = jnp.maximum(bn(y, p["gamma2"], p["beta2"], p["mean2"], p["var2"]), 0.0)
    skip = y
    pool = lax.reduce_window(y, -jnp.inf, lax.max,
                             (1, 1, 2, 2), (1, 1, 2, 2), "VALID")
    return pool, skip


if __name__ == "__main__":
    N, Cin, Cout, H, W = 2, 4, 8, 16, 16
    key = jax.random.PRNGKey(0)
    ks = jax.random.split(key, 11)

    params = dict(
        w1=jax.random.normal(ks[0], (Cout, Cin, 3, 3), jnp.float32) * 0.2,
        w2=jax.random.normal(ks[1], (Cout, Cout, 3, 3), jnp.float32) * 0.2,
        gamma1=jax.random.uniform(ks[2], (Cout,), jnp.float32, 0.5, 1.5),
        beta1=jax.random.normal(ks[3], (Cout,), jnp.float32) * 0.1,
        mean1=jax.random.normal(ks[4], (Cout,), jnp.float32) * 0.1,
        var1=jax.random.uniform(ks[5], (Cout,), jnp.float32, 0.5, 1.5),
        gamma2=jax.random.uniform(ks[6], (Cout,), jnp.float32, 0.5, 1.5),
        beta2=jax.random.normal(ks[7], (Cout,), jnp.float32) * 0.1,
        mean2=jax.random.normal(ks[8], (Cout,), jnp.float32) * 0.1,
        var2=jax.random.uniform(ks[9], (Cout,), jnp.float32, 0.5, 1.5),
    )
    x = jax.random.normal(ks[10], (N, Cin, H, W), jnp.float32)

    pool, skip = down_conv_with_maxpool(x, params)
    pool, skip = jax.block_until_ready((pool, skip))

    pool_ref, skip_ref = _reference(x, params)
    assert pool.shape == (N, Cout, H // 2, W // 2)
    assert skip.shape == (N, Cout, H, W)
    assert jnp.allclose(skip, skip_ref, atol=1e-4, rtol=1e-4)
    assert jnp.allclose(pool, pool_ref, atol=1e-4, rtol=1e-4)

    print("KERNEL_OK")
</pallas_src>

<mosaic_0001>
module attributes {stable_mosaic.version = 11 : i64} {
  func.func @kernel(%arg0: i32, %arg1: memref<1x8x512xf32, #tpu.memory_space<vmem>>, %arg2: memref<9x512xf32, #tpu.memory_space<vmem>>, %arg3: memref<8x72xf32, #tpu.memory_space<vmem>>, %arg4: memref<8x1xf32, #tpu.memory_space<vmem>>, %arg5: memref<8x72xf32, #tpu.memory_space<vmem>>, %arg6: memref<8x1xf32, #tpu.memory_space<vmem>>, %arg7: memref<512x128xf32, #tpu.memory_space<vmem>>, %arg8: memref<1x8x128xf32, #tpu.memory_space<vmem>>, %arg9: memref<1x8x512xf32, #tpu.memory_space<vmem>>) attributes {dimension_semantics = [#tpu.dimension_semantics<parallel>], iteration_bounds = array<i64: 1>, scalar_prefetch = 0 : i64, scratch_operands = 0 : i64, tpu.core_type = #tpu.core_type<tc>, window_params = [{transform_indices = @transform_0, window_bounds = array<i64: 1, 8, 512>}, {pipeline_mode = #tpu.pipeline_mode<synchronous>, transform_indices = @transform_1, window_bounds = array<i64: 9, 512>}, {pipeline_mode = #tpu.pipeline_mode<synchronous>, transform_indices = @transform_2, window_bounds = array<i64: 8, 72>}, {pipeline_mode = #tpu.pipeline_mode<synchronous>, transform_indices = @transform_3, window_bounds = array<i64: 8, 1>}, {pipeline_mode = #tpu.pipeline_mode<synchronous>, transform_indices = @transform_4, window_bounds = array<i64: 8, 72>}, {pipeline_mode = #tpu.pipeline_mode<synchronous>, transform_indices = @transform_5, window_bounds = array<i64: 8, 1>}, {pipeline_mode = #tpu.pipeline_mode<synchronous>, transform_indices = @transform_6, window_bounds = array<i64: 512, 128>}, {transform_indices = @transform_7, window_bounds = array<i64: 1, 8, 128>}, {transform_indices = @transform_8, window_bounds = array<i64: 1, 8, 512>}]} {
    %c0 = arith.constant 0 : index
    %c0_0 = arith.constant 0 : index
    %0 = vector.load %arg2[%c0, %c0_0] : memref<9x512xf32, #tpu.memory_space<vmem>>, vector<9x512xf32>
    %c0_1 = arith.constant 0 : index
    %c0_2 = arith.constant 0 : index
    %c0_3 = arith.constant 0 : index
    %1 = vector.load %arg1[%c0_1, %c0_2, %c0_3] : memref<1x8x512xf32, #tpu.memory_space<vmem>>, vector<1x8x512xf32>
    %2 = vector.shape_cast %1 : vector<1x8x512xf32> to vector<8x512xf32>
    %c0_4 = arith.constant 0 : index
    %c0_5 = arith.constant 0 : index
    %3 = vector.load %arg3[%c0_4, %c0_5] : memref<8x72xf32, #tpu.memory_space<vmem>>, vector<8x72xf32>
    %c17_i32 = arith.constant 17 : i32
    %4 = tpu.dynamic_rotate %2 by %c17_i32 dim 1 : vector<8x512xf32>, i32 -> vector<8x512xf32>
    %5 = vector.extract_strided_slice %0 {offsets = [0, 0], sizes = [1, 512], strides = [1, 1]} : vector<9x512xf32> to vector<1x512xf32>
    %6 = vector.broadcast %5 : vector<1x512xf32> to vector<8x512xf32>
    %7 = arith.mulf %4, %6 : vector<8x512xf32>
    %c16_i32 = arith.constant 16 : i32
    %8 = tpu.dynamic_rotate %2 by %c16_i32 dim 1 : vector<8x512xf32>, i32 -> vector<8x512xf32>
    %9 = vector.extract_strided_slice %0 {offsets = [1, 0], sizes = [1, 512], strides = [1, 1]} : vector<9x512xf32> to vector<1x512xf32>
    %10 = vector.broadcast %9 : vector<1x512xf32> to vector<8x512xf32>
    %11 = arith.mulf %8, %10 : vector<8x512xf32>
    %c15_i32 = arith.constant 15 : i32
    %12 = tpu.dynamic_rotate %2 by %c15_i32 dim 1 : vector<8x512xf32>, i32 -> vector<8x512xf32>
    %13 = vector.extract_strided_slice %0 {offsets = [2, 0], sizes = [1, 512], strides = [1, 1]} : vector<9x512xf32> to vector<1x512xf32>
    %14 = vector.broadcast %13 : vector<1x512xf32> to vector<8x512xf32>
    %15 = arith.mulf %12, %14 : vector<8x512xf32>
    %c1_i32 = arith.constant 1 : i32
    %16 = tpu.dynamic_rotate %2 by %c1_i32 dim 1 : vector<8x512xf32>, i32 -> vector<8x512xf32>
    %17 = vector.extract_strided_slice %0 {offsets = [3, 0], sizes = [1, 512], strides = [1, 1]} : vector<9x512xf32> to vector<1x512xf32>
    %18 = vector.broadcast %17 : vector<1x512xf32> to vector<8x512xf32>
    %19 = arith.mulf %16, %18 : vector<8x512xf32>
    %c511_i32 = arith.constant 511 : i32
    %20 = tpu.dynamic_rotate %2 by %c511_i32 dim 1 : vector<8x512xf32>, i32 -> vector<8x512xf32>
    %21 = vector.extract_strided_slice %0 {offsets = [5, 0], sizes = [1, 512], strides = [1, 1]} : vector<9x512xf32> to vector<1x512xf32>
    %22 = vector.broadcast %21 : vector<1x512xf32> to vector<8x512xf32>
    %23 = arith.mulf %20, %22 : vector<8x512xf32>
    %c497_i32 = arith.constant 497 : i32
    %24 = tpu.dynamic_rotate %2 by %c497_i32 dim 1 : vector<8x512xf32>, i32 -> vector<8x512xf32>
    %25 = vector.extract_strided_slice %0 {offsets = [6, 0], sizes = [1, 512], strides = [1, 1]} : vector<9x512xf32> to vector<1x512xf32>
    %26 = vector.broadcast %25 : vector<1x512xf32> to vector<8x512xf32>
    %27 = arith.mulf %24, %26 : vector<8x512xf32>
    %c496_i32 = arith.constant 496 : i32
    %28 = tpu.dynamic_rotate %2 by %c496_i32 dim 1 : vector<8x512xf32>, i32 -> vector<8x512xf32>
    %29 = vector.extract_strided_slice %0 {offsets = [7, 0], sizes = [1, 512], strides = [1, 1]} : vector<9x512xf32> to vector<1x512xf32>
    %30 = vector.broadcast %29 : vector<1x512xf32> to vector<8x512xf32>
    %31 = arith.mulf %28, %30 : vector<8x512xf32>
    %c495_i32 = arith.constant 495 : i32
    %32 = tpu.dynamic_rotate %2 by %c495_i32 dim 1 : vector<8x512xf32>, i32 -> vector<8x512xf32>
    %33 = vector.extract_strided_slice %0 {offsets = [8, 0], sizes = [1, 512], strides = [1, 1]} : vector<9x512xf32> to vector<1x512xf32>
    %34 = vector.broadcast %33 : vector<1x512xf32> to vector<8x512xf32>
    %35 = arith.mulf %32, %34 : vector<8x512xf32>
    %36 = tpu.concatenate %7, %11, %15, %19, %2, %23, %27, %31, %35 in 0 : vector<8x512xf32>, vector<8x512xf32>, vector<8x512xf32>, vector<8x512xf32>, vector<8x512xf32>, vector<8x512xf32>, vector<8x512xf32>, vector<8x512xf32>, vector<8x512xf32> -> vector<72x512xf32>
    %cst = arith.constant dense<0.000000e+00> : vector<8x512xf32>
    %37 = tpu.matmul %3, %36, %cst {dimension_numbers = #tpu.dot_dimension_numbers<[1], [0], [0], [1], [0, 0, 1, 1], [], []>} : vector<8x72xf32>, vector<72x512xf32>, vector<8x512xf32> -> vector<8x512xf32>
    %c0_6 = arith.constant 0 : index
    %c0_7 = arith.constant 0 : index
    %38 = vector.load %arg4[%c0_6, %c0_7] : memref<8x1xf32, #tpu.memory_space<vmem>>, vector<8x1xf32>
    %39 = vector.broadcast %38 : vector<8x1xf32> to vector<8x512xf32>
    %40 = arith.addf %37, %39 : vector<8x512xf32>
    %cst_8 = arith.constant 0.000000e+00 : f32
    %41 = vector.broadcast %cst_8 : f32 to vector<8x512xf32>
    %42 = arith.maximumf %40, %41 : vector<8x512xf32>
    %c0_9 = arith.constant 0 : index
    %c0_10 = arith.constant 0 : index
    %43 = vector.load %arg5[%c0_9, %c0_10] : memref<8x72xf32, #tpu.memory_space<vmem>>, vector<8x72xf32>
    %c17_i32_11 = arith.constant 17 : i32
    %44 = tpu.dynamic_rotate %42 by %c17_i32_11 dim 1 : vector<8x512xf32>, i32 -> vector<8x512xf32>
    %45 = vector.extract_strided_slice %0 {offsets = [0, 0], sizes = [1, 512], strides = [1, 1]} : vector<9x512xf32> to vector<1x512xf32>
    %46 = vector.broadcast %45 : vector<1x512xf32> to vector<8x512xf32>
    %47 = arith.mulf %44, %46 : vector<8x512xf32>
    %c16_i32_12 = arith.constant 16 : i32
    %48 = tpu.dynamic_rotate %42 by %c16_i32_12 dim 1 : vector<8x512xf32>, i32 -> vector<8x512xf32>
    %49 = vector.extract_strided_slice %0 {offsets = [1, 0], sizes = [1, 512], strides = [1, 1]} : vector<9x512xf32> to vector<1x512xf32>
    %50 = vector.broadcast %49 : vector<1x512xf32> to vector<8x512xf32>
    %51 = arith.mulf %48, %50 : vector<8x512xf32>
    %c15_i32_13 = arith.constant 15 : i32
    %52 = tpu.dynamic_rotate %42 by %c15_i32_13 dim 1 : vector<8x512xf32>, i32 -> vector<8x512xf32>
    %53 = vector.extract_strided_slice %0 {offsets = [2, 0], sizes = [1, 512], strides = [1, 1]} : vector<9x512xf32> to vector<1x512xf32>
    %54 = vector.broadcast %53 : vector<1x512xf32> to vector<8x512xf32>
    %55 = arith.mulf %52, %54 : vector<8x512xf32>
    %c1_i32_14 = arith.constant 1 : i32
    %56 = tpu.dynamic_rotate %42 by %c1_i32_14 dim 1 : vector<8x512xf32>, i32 -> vector<8x512xf32>
    %57 = vector.extract_strided_slice %0 {offsets = [3, 0], sizes = [1, 512], strides = [1, 1]} : vector<9x512xf32> to vector<1x512xf32>
    %58 = vector.broadcast %57 : vector<1x512xf32> to vector<8x512xf32>
    %59 = arith.mulf %56, %58 : vector<8x512xf32>
    %c511_i32_15 = arith.constant 511 : i32
    %60 = tpu.dynamic_rotate %42 by %c511_i32_15 dim 1 : vector<8x512xf32>, i32 -> vector<8x512xf32>
    %61 = vector.extract_strided_slice %0 {offsets = [5, 0], sizes = [1, 512], strides = [1, 1]} : vector<9x512xf32> to vector<1x512xf32>
    %62 = vector.broadcast %61 : vector<1x512xf32> to vector<8x512xf32>
    %63 = arith.mulf %60, %62 : vector<8x512xf32>
    %c497_i32_16 = arith.constant 497 : i32
    %64 = tpu.dynamic_rotate %42 by %c497_i32_16 dim 1 : vector<8x512xf32>, i32 -> vector<8x512xf32>
    %65 = vector.extract_strided_slice %0 {offsets = [6, 0], sizes = [1, 512], strides = [1, 1]} : vector<9x512xf32> to vector<1x512xf32>
    %66 = vector.broadcast %65 : vector<1x512xf32> to vector<8x512xf32>
    %67 = arith.mulf %64, %66 : vector<8x512xf32>
    %c496_i32_17 = arith.constant 496 : i32
    %68 = tpu.dynamic_rotate %42 by %c496_i32_17 dim 1 : vector<8x512xf32>, i32 -> vector<8x512xf32>
    %69 = vector.extract_strided_slice %0 {offsets = [7, 0], sizes = [1, 512], strides = [1, 1]} : vector<9x512xf32> to vector<1x512xf32>
    %70 = vector.broadcast %69 : vector<1x512xf32> to vector<8x512xf32>
    %71 = arith.mulf %68, %70 : vector<8x512xf32>
    %c495_i32_18 = arith.constant 495 : i32
    %72 = tpu.dynamic_rotate %42 by %c495_i32_18 dim 1 : vector<8x512xf32>, i32 -> vector<8x512xf32>
    %73 = vector.extract_strided_slice %0 {offsets = [8, 0], sizes = [1, 512], strides = [1, 1]} : vector<9x512xf32> to vector<1x512xf32>
    %74 = vector.broadcast %73 : vector<1x512xf32> to vector<8x512xf32>
    %75 = arith.mulf %72, %74 : vector<8x512xf32>
    %76 = tpu.concatenate %47, %51, %55, %59, %42, %63, %67, %71, %75 in 0 : vector<8x512xf32>, vector<8x512xf32>, vector<8x512xf32>, vector<8x512xf32>, vector<8x512xf32>, vector<8x512xf32>, vector<8x512xf32>, vector<8x512xf32>, vector<8x512xf32> -> vector<72x512xf32>
    %cst_19 = arith.constant dense<0.000000e+00> : vector<8x512xf32>
    %77 = tpu.matmul %43, %76, %cst_19 {dimension_numbers = #tpu.dot_dimension_numbers<[1], [0], [0], [1], [0, 0, 1, 1], [], []>} : vector<8x72xf32>, vector<72x512xf32>, vector<8x512xf32> -> vector<8x512xf32>
    %c0_20 = arith.constant 0 : index
    %c0_21 = arith.constant 0 : index
    %78 = vector.load %arg6[%c0_20, %c0_21] : memref<8x1xf32, #tpu.memory_space<vmem>>, vector<8x1xf32>
    %79 = vector.broadcast %78 : vector<8x1xf32> to vector<8x512xf32>
    %80 = arith.addf %77, %79 : vector<8x512xf32>
    %cst_22 = arith.constant 0.000000e+00 : f32
    %81 = vector.broadcast %cst_22 : f32 to vector<8x512xf32>
    %82 = arith.maximumf %80, %81 : vector<8x512xf32>
    %c0_23 = arith.constant 0 : index
    %c0_24 = arith.constant 0 : index
    %c0_25 = arith.constant 0 : index
    %83 = vector.load %arg9[%c0_23, %c0_24, %c0_25] : memref<1x8x512xf32, #tpu.memory_space<vmem>>, vector<1x8x512xf32>
    %84 = vector.shape_cast %83 : vector<1x8x512xf32> to vector<8x512xf32>
    %85 = vector.shape_cast %82 : vector<8x512xf32> to vector<1x8x512xf32>
    tpu.vector_store %arg9[%c0_23, %c0_24, %c0_25], %85 {strides = array<i32>} : memref<1x8x512xf32, #tpu.memory_space<vmem>>, vector<1x8x512xf32>,
    %c511_i32_26 = arith.constant 511 : i32
    %86 = tpu.dynamic_rotate %82 by %c511_i32_26 dim 1 : vector<8x512xf32>, i32 -> vector<8x512xf32>
    %87 = arith.maximumf %82, %86 : vector<8x512xf32>
    %c496_i32_27 = arith.constant 496 : i32
    %88 = tpu.dynamic_rotate %87 by %c496_i32_27 dim 1 : vector<8x512xf32>, i32 -> vector<8x512xf32>
    %89 = arith.maximumf %87, %88 : vector<8x512xf32>
    %c0_28 = arith.constant 0 : index
    %c0_29 = arith.constant 0 : index
    %90 = vector.load %arg7[%c0_28, %c0_29] : memref<512x128xf32, #tpu.memory_space<vmem>>, vector<512x128xf32>
    %cst_30 = arith.constant dense<0.000000e+00> : vector<8x128xf32>
    %91 = tpu.matmul %89, %90, %cst_30 {dimension_numbers = #tpu.dot_dimension_numbers<[1], [0], [0], [1], [0, 0, 1, 1], [], []>} : vector<8x512xf32>, vector<512x128xf32>, vector<8x128xf32> -> vector<8x128xf32>
    %c0_31 = arith.constant 0 : index
    %c0_32 = arith.constant 0 : index
    %c0_33 = arith.constant 0 : index
    %92 = vector.load %arg8[%c0_31, %c0_32, %c0_33] : memref<1x8x128xf32, #tpu.memory_space<vmem>>, vector<1x8x128xf32>
    %93 = vector.shape_cast %92 : vector<1x8x128xf32> to vector<8x128xf32>
    %94 = vector.shape_cast %91 : vector<8x128xf32> to vector<1x8x128xf32>
    tpu.vector_store %arg8[%c0_31, %c0_32, %c0_33], %94 {strides = array<i32>} : memref<1x8x128xf32, #tpu.memory_space<vmem>>, vector<1x8x128xf32>,
    return
  }
  func.func @transform_0(%arg0: i32) -> (i32, i32, i32) {
    %c0_i32 = arith.constant 0 : i32
    %c0_i32_0 = arith.constant 0 : i32
    %c0_i32_1 = arith.constant 0 : i32
    return %arg0, %c0_i32, %c0_i32_0 : i32, i32, i32
  }
  func.func @transform_1(%arg0: i32) -> (i32, i32) {
    %c0_i32 = arith.constant 0 : i32
    %c0_i32_0 = arith.constant 0 : i32
    %c0_i32_1 = arith.constant 0 : i32
    return %c0_i32, %c0_i32_0 : i32, i32
  }
  func.func @transform_2(%arg0: i32) -> (i32, i32) {
    %c0_i32 = arith.constant 0 : i32
    %c0_i32_0 = arith.constant 0 : i32
    %c0_i32_1 = arith.constant 0 : i32
    return %c0_i32, %c0_i32_0 : i32, i32
  }
  func.func @transform_3(%arg0: i32) -> (i32, i32) {
    %c0_i32 = arith.constant 0 : i32
    %c0_i32_0 = arith.constant 0 : i32
    %c0_i32_1 = arith.constant 0 : i32
    return %c0_i32, %c0_i32_0 : i32, i32
  }
  func.func @transform_4(%arg0: i32) -> (i32, i32) {
    %c0_i32 = arith.constant 0 : i32
    %c0_i32_0 = arith.constant 0 : i32
    %c0_i32_1 = arith.constant 0 : i32
    return %c0_i32, %c0_i32_0 : i32, i32
  }
  func.func @transform_5(%arg0: i32) -> (i32, i32) {
    %c0_i32 = arith.constant 0 : i32
    %c0_i32_0 = arith.constant 0 : i32
    %c0_i32_1 = arith.constant 0 : i32
    return %c0_i32, %c0_i32_0 : i32, i32
  }
  func.func @transform_6(%arg0: i32) -> (i32, i32) {
    %c0_i32 = arith.constant 0 : i32
    %c0_i32_0 = arith.constant 0 : i32
    %c0_i32_1 = arith.constant 0 : i32
    return %c0_i32, %c0_i32_0 : i32, i32
  }
  func.func @transform_7(%arg0: i32) -> (i32, i32, i32) {
    %c0_i32 = arith.constant 0 : i32
    %c0_i32_0 = arith.constant 0 : i32
    %c0_i32_1 = arith.constant 0 : i32
    return %arg0, %c0_i32, %c0_i32_0 : i32, i32, i32
  }
  func.func @transform_8(%arg0: i32) -> (i32, i32, i32) {
    %c0_i32 = arith.constant 0 : i32
    %c0_i32_0 = arith.constant 0 : i32
    %c0_i32_1 = arith.constant 0 : i32
    return %arg0, %c0_i32, %c0_i32_0 : i32, i32, i32
  }
}

</mosaic_0001>

<llo_original>
// kernel: tpu_custom_call.1
$region0: #{tpu_custom_call.1}
  #allocation0 [shape = 'u32[]', space=smem, size = 0x4, offset = 0x4, fixed_abs, tag = 'smem constant byte address 0x4 - core index']
  #allocation1 [shape = 'u32[144,128]{1,0:T(1,128)}', space=vmem, size = 0x12000, scoped, tag = 'internal scratch']
  %s0 = inlined_call_operand.hbm [shape: f32[1,8,512], index: 0, kind: input, shape index: {}]
  %s1 = inlined_call_operand.hbm [shape: f32[9,512], index: 1, kind: input, shape index: {}]
  %s2 = inlined_call_operand.vmem [shape: f32[8,72], index: 2, kind: input, shape index: {}]
  %s3 = inlined_call_operand.vmem [shape: f32[8,1], index: 3, kind: input, shape index: {}]
  %s4 = inlined_call_operand.vmem [shape: f32[8,72], index: 4, kind: input, shape index: {}]
  %s5 = inlined_call_operand.vmem [shape: f32[8,1], index: 5, kind: input, shape index: {}]
  %s6 = inlined_call_operand.hbm [shape: f32[512,128], index: 6, kind: input, shape index: {}]
  %s7 = inlined_call_operand.hbm [shape: f32[1,8,128], index: 7, kind: output, shape index: {0}]
  %s8 = inlined_call_operand.hbm [shape: f32[1,8,512], index: 8, kind: output, shape index: {1}]
  %9 = xla_tuple %s7, %s8
  %s10 = sld [smem:[#allocation0]]
  $region58: #{tpu_custom_call.1} parent=0
    _
  %s12 = ssub.s32 1, %s10
  %s13 = scalar_select 0, %s12, %s10
  $region1: #{tpu_custom_call.1} parent=0
    #allocation2 [shape = 'u8[16384]{0}', space=vmem, size = 0x4000, scoped, tag = 'input window, operand 0, single buffered']
    #allocation3 [shape = 's32[1]{0}', space=sflag, size = 0x4, scoped, tag = 'scoped memory for tpu_custom_call.1']
    #allocation4 [shape = 's32[1]{0}', space=sflag, size = 0x4, scoped, tag = 'scoped memory for tpu_custom_call.1']
    #allocation5 [shape = 'u8[32768]{0}', space=vmem, size = 0x8000, scoped, tag = 'input window, operand 1, single buffered']
    #allocation6 [shape = 's32[1]{0}', space=sflag, size = 0x4, scoped, tag = 'scoped memory for tpu_custom_call.1']
    #allocation7 [shape = 'u8[262144]{0}', space=vmem, size = 0x40000, scoped, tag = 'input window, operand 6, single buffered']
    #allocation8 [shape = 'u8[4096]{0}', space=vmem, size = 0x1000, scoped, tag = 'output window, operand 0, single buffered']
    #allocation9 [shape = 'u8[16384]{0}', space=vmem, size = 0x4000, scoped, tag = 'output window, operand 1, single buffered']
    #allocation10 [shape = 's32[1]{0}', space=sflag, size = 0x4, scoped, tag = 'scoped memory for tpu_custom_call.1']
    %14 = vsyncpa [#allocation3], 0
    %15 = vsyncpa [#allocation6], 0
    %16 = vsyncpa [#allocation4], 0
    %17 = vsyncpa [#allocation10], 0
    // Predicated region
    $region2: #{tpu_custom_call.1} parent=1 // pred_check
      _
    $region3: #{tpu_custom_call.1} parent=1 // pred_check_branch
      %19 = sbr.rel (0) target = $region5
    $region4: #{tpu_custom_call.1} parent=1 // pred_region
      %s21 = ssub.s32 512, 512
      %22 = vsyncadd [#allocation3], %s21
      %s24 = sshll.u32 [#allocation2], 4
      %s25 = int_to_ptr.vmem [resolvable:$true] %s24
      %27 = dma.hbm_to_vmem [thread:$0]  %s0, 512, %s25, [#allocation3]
    $region5: #{tpu_custom_call.1} parent=1 // pred_fallthru
      _
    // Predicated region
    $region6: #{tpu_custom_call.1} parent=1 // pred_check
      _
    $region7: #{tpu_custom_call.1} parent=1 // pred_check_branch
      %29 = sbr.rel (0) target = $region9
    $region8: #{tpu_custom_call.1} parent=1 // pred_region
      %s31 = ssub.s32 1024, 1024
      %32 = vsyncadd [#allocation6], %s31
      %s33 = sshll.u32 [#allocation5], 4
      %s34 = int_to_ptr.vmem [resolvable:$true] %s33
      %39 = dma.hbm_to_vmem [thread:$0]  %s1, 1024, %s34, [#allocation6], 512, 512, 32
    $region9: #{tpu_custom_call.1} parent=1 // pred_fallthru
      _
    // Predicated region
    $region10: #{tpu_custom_call.1} parent=1 // pred_check
      _
    $region11: #{tpu_custom_call.1} parent=1 // pred_check_branch
      %41 = sbr.rel (0) target = $region13
    $region12: #{tpu_custom_call.1} parent=1 // pred_region
      _
    $region13: #{tpu_custom_call.1} parent=1 // pred_fallthru
      _
    // Predicated region
    $region14: #{tpu_custom_call.1} parent=1 // pred_check
      _
    $region15: #{tpu_custom_call.1} parent=1 // pred_check_branch
      %43 = sbr.rel (0) target = $region17
    $region16: #{tpu_custom_call.1} parent=1 // pred_region
      _
    $region17: #{tpu_custom_call.1} parent=1 // pred_fallthru
      _
    // Predicated region
    $region18: #{tpu_custom_call.1} parent=1 // pred_check
      _
    $region19: #{tpu_custom_call.1} parent=1 // pred_check_branch
      %45 = sbr.rel (0) target = $region21
    $region20: #{tpu_custom_call.1} parent=1 // pred_region
      _
    $region21: #{tpu_custom_call.1} parent=1 // pred_fallthru
      _
    // Predicated region
    $region22: #{tpu_custom_call.1} parent=1 // pred_check
      _
    $region23: #{tpu_custom_call.1} parent=1 // pred_check_branch
      %47 = sbr.rel (0) target = $region25
    $region24: #{tpu_custom_call.1} parent=1 // pred_region
      _
    $region25: #{tpu_custom_call.1} parent=1 // pred_fallthru
      _
    // Predicated region
    $region26: #{tpu_custom_call.1} parent=1 // pred_check
      _
    $region27: #{tpu_custom_call.1} parent=1 // pred_check_branch
      %49 = sbr.rel (0) target = $region29
    $region28: #{tpu_custom_call.1} parent=1 // pred_region
      %s51 = ssub.s32 8192, 8192
      %52 = vsyncadd [#allocation6], %s51
      %s53 = sshll.u32 [#allocation7], 4
      %s54 = int_to_ptr.vmem [resolvable:$true] %s53
      %59 = dma.hbm_to_vmem [thread:$0]  %s6, 8192, %s54, [#allocation6], 128, 128, 8
    $region29: #{tpu_custom_call.1} parent=1 // pred_fallthru
      _
    // Predicated region
    $region30: #{tpu_custom_call.1} parent=1 // pred_check
      _
    $region31: #{tpu_custom_call.1} parent=1 // pred_check_branch
      %61 = sbr.rel (0) target = $region33
    $region32: #{tpu_custom_call.1} parent=1 // pred_region
      %62 = dma.done [#allocation3], 512
    $region33: #{tpu_custom_call.1} parent=1 // pred_fallthru
      _
    // Predicated region
    $region34: #{tpu_custom_call.1} parent=1 // pred_check
      _
    $region35: #{tpu_custom_call.1} parent=1 // pred_check_branch
      %64 = sbr.rel (0) target = $region37
    $region36: #{tpu_custom_call.1} parent=1 // pred_region
      %65 = dma.done [#allocation6], 1024
    $region37: #{tpu_custom_call.1} parent=1 // pred_fallthru
      _
    // Predicated region
    $region38: #{tpu_custom_call.1} parent=1 // pred_check
      _
    $region39: #{tpu_custom_call.1} parent=1 // pred_check_branch
      %67 = sbr.rel (0) target = $region41
    $region40: #{tpu_custom_call.1} parent=1 // pred_region
      %68 = dma.done [#allocation6], 8192
    $region41: #{tpu_custom_call.1} parent=1 // pred_fallthru
      _
    %v69 = vld [vmem:[#allocation5] sm:$0xff]
    %v70 = vld [vmem:[#allocation5 + $0x8] sm:$0xff]
    %v71 = vld [vmem:[#allocation5 + $0x10] sm:$0xff]
    %v72 = vld [vmem:[#allocation5 + $0x18] sm:$0xff]
    %v73 = vld [vmem:[#allocation5 + $0x20] sm:$0x1]
    %v74 = vld [vmem:[#allocation5 + $0x28] sm:$0x1]
    %v75 = vld [vmem:[#allocation5 + $0x30] sm:$0x1]
    %v76 = vld [vmem:[#allocation5 + $0x38] sm:$0x1]
    %v77 = vld [vmem:[#allocation2] sm:$0xff]
    %v78 = vld [vmem:[#allocation2 + $0x8] sm:$0xff]
    %v79 = vld [vmem:[#allocation2 + $0x10] sm:$0xff]
    %v80 = vld [vmem:[#allocation2 + $0x18] sm:$0xff]
    %v81 = vld [vmem:[%s2] sm:$0xff]
    %82 = vrot.lane.b32.xlu0 %v77, 17
    %v83 = vpop.permute.xlu0 %82
    %84 = vrot.lane.b32.xlu0 %v78, 17
    %v85 = vpop.permute.xlu0 %84
    %86 = vrot.lane.b32.xlu0 %v79, 17
    %v87 = vpop.permute.xlu0 %86
    %88 = vrot.lane.b32.xlu0 %v80, 17
    %v89 = vpop.permute.xlu0 %88
    %v90 = vlaneseq
    %v91 = vand.u32 %v90, 127
    %vm92 = vcmp.lt.s32.totalorder %v91, 17
    %v93 = vsel %vm92, %v87, %v89
    %v94 = vsel %vm92, %v85, %v87
    %v95 = vsel %vm92, %v83, %v85
    %v96 = vsel %vm92, %v89, %v83
    %v97 = vlaneseq
    %v98 = vshrl.u32 %v97, 7
    %v99 = vsub.s32 0, %v98
    %v100 = vrot.slane %v69, %v99
    %v101 = vlaneseq
    %v102 = vshrl.u32 %v101, 7
    %v103 = vsub.s32 0, %v102
    %v104 = vrot.slane %v70, %v103
    %v105 = vlaneseq
    %v106 = vshrl.u32 %v105, 7
    %v107 = vsub.s32 0, %v106
    %v108 = vrot.slane %v71, %v107
    %v109 = vlaneseq
    %v110 = vshrl.u32 %v109, 7
    %v111 = vsub.s32 0, %v110
    %v112 = vrot.slane %v72, %v111
    %v113 = vmul.f32 %v96, %v100
    %v114 = vmul.f32 %v95, %v104
    %v115 = vmul.f32 %v94, %v108
    %v116 = vmul.f32 %v93, %v112
    %117 = vrot.lane.b32.xlu0 %v77, 16
    %v118 = vpop.permute.xlu0 %117
    %119 = vrot.lane.b32.xlu0 %v78, 16
    %v120 = vpop.permute.xlu0 %119
    %121 = vrot.lane.b32.xlu0 %v79, 16
    %v122 = vpop.permute.xlu0 %121
    %123 = vrot.lane.b32.xlu0 %v80, 16
    %v124 = vpop.permute.xlu0 %123
    %vm125 = vcmp.lt.s32.totalorder %v91, 16
    %v126 = vsel %vm125, %v122, %v124
    %v127 = vsel %vm125, %v120, %v122
    %v128 = vsel %vm125, %v118, %v120
    %v129 = vsel %vm125, %v124, %v118
    %v130 = vlaneseq
    %v131 = vshrl.u32 %v130, 7
    %v132 = vsub.s32 1, %v131
    %v133 = vrot.slane %v69, %v132
    %v134 = vlaneseq
    %v135 = vshrl.u32 %v134, 7
    %v136 = vsub.s32 1, %v135
    %v137 = vrot.slane %v70, %v136
    %v138 = vlaneseq
    %v139 = vshrl.u32 %v138, 7
    %v140 = vsub.s32 1, %v139
    %v141 = vrot.slane %v71, %v140
    %v142 = vlaneseq
    %v143 = vshrl.u32 %v142, 7
    %v144 = vsub.s32 1, %v143
    %v145 = vrot.slane %v72, %v144
    %v146 = vmul.f32 %v129, %v133
    %v147 = vmul.f32 %v128, %v137
    %v148 = vmul.f32 %v127, %v141
    %v149 = vmul.f32 %v126, %v145
    %150 = vrot.lane.b32.xlu0 %v77, 15
    %v151 = vpop.permute.xlu0 %150
    %152 = vrot.lane.b32.xlu0 %v78, 15
    %v153 = vpop.permute.xlu0 %152
    %154 = vrot.lane.b32.xlu0 %v79, 15
    %v155 = vpop.permute.xlu0 %154
    %156 = vrot.lane.b32.xlu0 %v80, 15
    %v157 = vpop.permute.xlu0 %156
    %vm158 = vcmp.lt.s32.totalorder %v91, 15
    %v159 = vsel %vm158, %v155, %v157
    %v160 = vsel %vm158, %v153, %v155
    %v161 = vsel %vm158, %v151, %v153
    %v162 = vsel %vm158, %v157, %v151
    %v163 = vlaneseq
    %v164 = vshrl.u32 %v163, 7
    %v165 = vsub.s32 2, %v164
    %v166 = vrot.slane %v69, %v165
    %v167 = vlaneseq
    %v168 = vshrl.u32 %v167, 7
    %v169 = vsub.s32 2, %v168
    %v170 = vrot.slane %v70, %v169
    %v171 = vlaneseq
    %v172 = vshrl.u32 %v171, 7
    %v173 = vsub.s32 2, %v172
    %v174 = vrot.slane %v71, %v173
    %v175 = vlaneseq
    %v176 = vshrl.u32 %v175, 7
    %v177 = vsub.s32 2, %v176
    %v178 = vrot.slane %v72, %v177
    %v179 = vmul.f32 %v162, %v166
    %v180 = vmul.f32 %v161, %v170
    %v181 = vmul.f32 %v160, %v174
    %v182 = vmul.f32 %v159, %v178
    %183 = vrot.lane.b32.xlu0 %v77, 1
    %v184 = vpop.permute.xlu0 %183
    %185 = vrot.lane.b32.xlu0 %v78, 1
    %v186 = vpop.permute.xlu0 %185
    %187 = vrot.lane.b32.xlu0 %v79, 1
    %v188 = vpop.permute.xlu0 %187
    %189 = vrot.lane.b32.xlu0 %v80, 1
    %v190 = vpop.permute.xlu0 %189
    %vm191 = vcmp.lt.s32.totalorder %v91, 1
    %v192 = vsel %vm191, %v188, %v190
    %v193 = vsel %vm191, %v186, %v188
    %v194 = vsel %vm191, %v184, %v186
    %v195 = vsel %vm191, %v190, %v184
    %v196 = vlaneseq
    %v197 = vshrl.u32 %v196, 7
    %v198 = vsub.s32 3, %v197
    %v199 = vrot.slane %v69, %v198
    %v200 = vlaneseq
    %v201 = vshrl.u32 %v200, 7
    %v202 = vsub.s32 3, %v201
    %v203 = vrot.slane %v70, %v202
    %v204 = vlaneseq
    %v205 = vshrl.u32 %v204, 7
    %v206 = vsub.s32 3, %v205
    %v207 = vrot.slane %v71, %v206
    %v208 = vlaneseq
    %v209 = vshrl.u32 %v208, 7
    %v210 = vsub.s32 3, %v209
    %v211 = vrot.slane %v72, %v210
    %v212 = vmul.f32 %v195, %v199
    %v213 = vmul.f32 %v194, %v203
    %v214 = vmul.f32 %v193, %v207
    %v215 = vmul.f32 %v192, %v211
    %216 = vrot.lane.b32.xlu0 %v77, 127
    %v217 = vpop.permute.xlu0 %216
    %218 = vrot.lane.b32.xlu0 %v78, 127
    %v219 = vpop.permute.xlu0 %218
    %220 = vrot.lane.b32.xlu0 %v79, 127
    %v221 = vpop.permute.xlu0 %220
    %222 = vrot.lane.b32.xlu0 %v80, 127
    %v223 = vpop.permute.xlu0 %222
    %vm224 = vcmp.lt.s32.totalorder %v91, 127
    %v225 = vsel %vm224, %v221, %v223
    %v226 = vsel %vm224, %v219, %v221
    %v227 = vsel %vm224, %v217, %v219
    %v228 = vsel %vm224, %v223, %v217
    %v229 = vlaneseq
    %v230 = vshrl.u32 %v229, 7
    %v231 = vsub.s32 5, %v230
    %v232 = vrot.slane %v69, %v231
    %v233 = vlaneseq
    %v234 = vshrl.u32 %v233, 7
    %v235 = vsub.s32 5, %v234
    %v236 = vrot.slane %v70, %v235
    %v237 = vlaneseq
    %v238 = vshrl.u32 %v237, 7
    %v239 = vsub.s32 5, %v238
    %v240 = vrot.slane %v71, %v239
    %v241 = vlaneseq
    %v242 = vshrl.u32 %v241, 7
    %v243 = vsub.s32 5, %v242
    %v244 = vrot.slane %v72, %v243
    %v245 = vmul.f32 %v227, %v232
    %v246 = vmul.f32 %v226, %v236
    %v247 = vmul.f32 %v225, %v240
    %v248 = vmul.f32 %v228, %v244
    %249 = vrot.lane.b32.xlu0 %v77, 113
    %v250 = vpop.permute.xlu0 %249
    %251 = vrot.lane.b32.xlu0 %v78, 113
    %v252 = vpop.permute.xlu0 %251
    %253 = vrot.lane.b32.xlu0 %v79, 113
    %v254 = vpop.permute.xlu0 %253
    %255 = vrot.lane.b32.xlu0 %v80, 113
    %v256 = vpop.permute.xlu0 %255
    %vm257 = vcmp.lt.s32.totalorder %v91, 113
    %v258 = vsel %vm257, %v254, %v256
    %v259 = vsel %vm257, %v252, %v254
    %v260 = vsel %vm257, %v250, %v252
    %v261 = vsel %vm257, %v256, %v250
    %v262 = vlaneseq
    %v263 = vshrl.u32 %v262, 7
    %v264 = vsub.s32 6, %v263
    %v265 = vrot.slane %v69, %v264
    %v266 = vlaneseq
    %v267 = vshrl.u32 %v266, 7
    %v268 = vsub.s32 6, %v267
    %v269 = vrot.slane %v70, %v268
    %v270 = vlaneseq
    %v271 = vshrl.u32 %v270, 7
    %v272 = vsub.s32 6, %v271
    %v273 = vrot.slane %v71, %v272
    %v274 = vlaneseq
    %v275 = vshrl.u32 %v274, 7
    %v276 = vsub.s32 6, %v275
    %v277 = vrot.slane %v72, %v276
    %v278 = vmul.f32 %v260, %v265
    %v279 = vmul.f32 %v259, %v269
    %v280 = vmul.f32 %v258, %v273
    %v281 = vmul.f32 %v261, %v277
    %282 = vrot.lane.b32.xlu0 %v77, 112
    %v283 = vpop.permute.xlu0 %282
    %284 = vrot.lane.b32.xlu0 %v78, 112
    %v285 = vpop.permute.xlu0 %284
    %286 = vrot.lane.b32.xlu0 %v79, 112
    %v287 = vpop.permute.xlu0 %286
    %288 = vrot.lane.b32.xlu0 %v80, 112
    %v289 = vpop.permute.xlu0 %288
    %vm290 = vcmp.lt.s32.totalorder %v91, 112
    %v291 = vsel %vm290, %v287, %v289
    %v292 = vsel %vm290, %v285, %v287
    %v293 = vsel %vm290, %v283, %v285
    %v294 = vsel %vm290, %v289, %v283
    %v295 = vlaneseq
    %v296 = vshrl.u32 %v295, 7
    %v297 = vsub.s32 7, %v296
    %v298 = vrot.slane %v69, %v297
    %v299 = vlaneseq
    %v300 = vshrl.u32 %v299, 7
    %v301 = vsub.s32 7, %v300
    %v302 = vrot.slane %v70, %v301
    %v303 = vlaneseq
    %v304 = vshrl.u32 %v303, 7
    %v305 = vsub.s32 7, %v304
    %v306 = vrot.slane %v71, %v305
    %v307 = vlaneseq
    %v308 = vshrl.u32 %v307, 7
    %v309 = vsub.s32 7, %v308
    %v310 = vrot.slane %v72, %v309
    %v311 = vmul.f32 %v293, %v298
    %v312 = vmul.f32 %v292, %v302
    %v313 = vmul.f32 %v291, %v306
    %v314 = vmul.f32 %v294, %v310
    %315 = vrot.lane.b32.xlu0 %v77, 111
    %v316 = vpop.permute.xlu0 %315
    %317 = vrot.lane.b32.xlu0 %v78, 111
    %v318 = vpop.permute.xlu0 %317
    %319 = vrot.lane.b32.xlu0 %v79, 111
    %v320 = vpop.permute.xlu0 %319
    %321 = vrot.lane.b32.xlu0 %v80, 111
    %v322 = vpop.permute.xlu0 %321
    %vm323 = vcmp.lt.s32.totalorder %v91, 111
    %v324 = vsel %vm323, %v320, %v322
    %v325 = vsel %vm323, %v318, %v320
    %v326 = vsel %vm323, %v316, %v318
    %v327 = vsel %vm323, %v322, %v316
    %v328 = vlaneseq
    %v329 = vshrl.u32 %v328, 7
    %v330 = vsub.s32 0, %v329
    %v331 = vrot.slane %v73, %v330
    %v332 = vlaneseq
    %v333 = vshrl.u32 %v332, 7
    %v334 = vsub.s32 0, %v333
    %v335 = vrot.slane %v74, %v334
    %v336 = vlaneseq
    %v337 = vshrl.u32 %v336, 7
    %v338 = vsub.s32 0, %v337
    %v339 = vrot.slane %v75, %v338
    %v340 = vlaneseq
    %v341 = vshrl.u32 %v340, 7
    %v342 = vsub.s32 0, %v341
    %v343 = vrot.slane %v76, %v342
    %v344 = vmul.f32 %v326, %v331
    %v345 = vmul.f32 %v325, %v335
    %v346 = vmul.f32 %v324, %v339
    %v347 = vmul.f32 %v327, %v343
    %v348 = vld [vmem:[%s3] sm:$0xff]
    %350 = vset.pattern.permute.xlu0 0
    %351 = vperm.xlu0 %350, %v348
    %v352 = vpop.permute.xlu0 %351
    %vm354 = vcmask 588800
    %v356 = vsel %vm354, %v81, 0
    %358 = vmatprep.subr.mxu0 %v114
    %359 = vmatpush1.msra.mxu0 %v113
    %360 = vmatprep.subr.mxu0 %v147
    %361 = vmatpush1.msra.mxu0 %v146
    %362 = vmatprep.subr.mxu0 %v180
    %363 = vmatpush1.msra.mxu0 %v179
    %364 = vmatprep.subr.mxu0 %v213
    %365 = vmatpush1.msra.mxu0 %v212
    %366 = vmatprep.subr.mxu0 %v78
    %367 = vmatpush1.msra.mxu0 %v77
    %368 = vmatprep.subr.mxu0 %v246
    %369 = vmatpush1.msra.mxu0 %v245
    %370 = vmatprep.subr.mxu0 %v279
    %371 = vmatpush1.msra.mxu0 %v278
    %372 = vmatprep.subr.mxu0 %v312
    %373 = vmatpush1.msra.mxu0 %v311
    %374 = vmatprep.subr.mxu0 %v345
    %375 = vmatpush1.msra.mxu0 %v344
    %376 = vmatprep.subr.mxu0 0.0
    %377 = vmatpush1.msra.mxu0 0.0
    %378 = vmatprep.subr.mxu0 0.0
    %379 = vmatpush1.msra.mxu0 0.0
    %380 = vmatprep.subr.mxu0 0.0
    %381 = vmatpush1.msra.mxu0 0.0
    %382 = vmatprep.subr.mxu0 0.0
    %383 = vmatpush1.msra.mxu0 0.0
    %384 = vmatprep.subr.mxu0 0.0
    %385 = vmatpush1.msra.mxu0 0.0
    %386 = vmatprep.subr.mxu0 0.0
    %387 = vmatpush1.msra.mxu0 0.0
    %388 = vmatprep.subr.mxu0 0.0
    %389 = vmatpush1.msra.mxu0 0.0
    %390 = vmatprep.subr.mxu0 0.0
    %391 = vmatpush1.msra.mxu0 0.0
    %392 = vmatprep.subr.mxu0 0.0
    %393 = vmatpush1.msra.mxu0 0.0
    %394 = vmatprep.subr.mxu0 0.0
    %395 = vmatpush1.msra.mxu0 0.0
    %396 = vmatprep.subr.mxu0 0.0
    %397 = vmatpush1.msra.mxu0 0.0
    %398 = vmatprep.subr.mxu0 0.0
    %399 = vmatpush1.msra.mxu0 0.0
    %400 = vmatprep.subr.mxu0 0.0
    %401 = vmatpush1.msra.mxu0 0.0
    %402 = vmatprep.subr.mxu0 0.0
    %403 = vmatpush1.msra.mxu0 0.0
    %404 = vmatprep.subr.mxu0 0.0
    %405 = vmatpush1.msra.mxu0 0.0
    %406 = vmatprep.subr.mxu0 0.0
    %407 = vmatpush1.msra.mxu0 0.0
    %408 = vmatprep.subr.mxu0 0.0
    %409 = vmatpush1.msra.mxu0 0.0
    %410 = vmatprep.subr.mxu0 0.0
    %411 = vmatpush1.msra.mxu0 0.0
    %412 = vmatprep.subr.mxu0 0.0
    %413 = vmatpush1.msra.mxu0 0.0
    %414 = vmatprep.subr.mxu0 0.0
    %415 = vmatpush1.msra.mxu0 0.0
    %416 = vmatprep.subr.mxu0 0.0
    %417 = vmatpush1.msra.mxu0 0.0
    %418 = vmatprep.subr.mxu0 0.0
    %419 = vmatpush1.msra.mxu0 0.0
    %420 = vmatprep.subr.mxu0 0.0
    %421 = vmatpush1.msra.mxu0 0.0
    %422 = vmatprep.mubr.f32.mxu0 0.0
    %423 = vmatmul.mubr.f32.gmra.mrb[0].mxu0 %v356
    %v424 = vpop.f32.mrb[0].mxu0
    %v425 = vadd.f32 %v352, %v424
    %v426 = vpop.f32.mrb[0].mxu0
    %v427 = vadd.f32 %v352, %v426
    %428 = vdwg.mxu0
    %429 = vmatprep.subr.mxu0 %v116
    %430 = vmatpush1.msra.mxu0 %v115
    %431 = vmatprep.subr.mxu0 %v149
    %432 = vmatpush1.msra.mxu0 %v148
    %433 = vmatprep.subr.mxu0 %v182
    %434 = vmatpush1.msra.mxu0 %v181
    %435 = vmatprep.subr.mxu0 %v215
    %436 = vmatpush1.msra.mxu0 %v214
    %437 = vmatprep.subr.mxu0 %v80
    %438 = vmatpush1.msra.mxu0 %v79
    %439 = vmatprep.subr.mxu0 %v248
    %440 = vmatpush1.msra.mxu0 %v247
    %441 = vmatprep.subr.mxu0 %v281
    %442 = vmatpush1.msra.mxu0 %v280
    %443 = vmatprep.subr.mxu0 %v314
    %444 = vmatpush1.msra.mxu0 %v313
    %445 = vmatprep.subr.mxu0 %v347
    %446 = vmatpush1.msra.mxu0 %v346
    %447 = vmatprep.subr.mxu0 0.0
    %448 = vmatpush1.msra.mxu0 0.0
    %449 = vmatprep.subr.mxu0 0.0
    %450 = vmatpush1.msra.mxu0 0.0
    %451 = vmatprep.subr.mxu0 0.0
    %452 = vmatpush1.msra.mxu0 0.0
    %453 = vmatprep.subr.mxu0 0.0
    %454 = vmatpush1.msra.mxu0 0.0
    %455 = vmatprep.subr.mxu0 0.0
    %456 = vmatpush1.msra.mxu0 0.0
    %457 = vmatprep.subr.mxu0 0.0
    %458 = vmatpush1.msra.mxu0 0.0
    %459 = vmatprep.subr.mxu0 0.0
    %460 = vmatpush1.msra.mxu0 0.0
    %461 = vmatprep.subr.mxu0 0.0
    %462 = vmatpush1.msra.mxu0 0.0
    %463 = vmatprep.subr.mxu0 0.0
    %464 = vmatpush1.msra.mxu0 0.0
    %465 = vmatprep.subr.mxu0 0.0
    %466 = vmatpush1.msra.mxu0 0.0
    %467 = vmatprep.subr.mxu0 0.0
    %468 = vmatpush1.msra.mxu0 0.0
    %469 = vmatprep.subr.mxu0 0.0
    %470 = vmatpush1.msra.mxu0 0.0
    %471 = vmatprep.subr.mxu0 0.0
    %472 = vmatpush1.msra.mxu0 0.0
    %473 = vmatprep.subr.mxu0 0.0
    %474 = vmatpush1.msra.mxu0 0.0
    %475 = vmatprep.subr.mxu0 0.0
    %476 = vmatpush1.msra.mxu0 0.0
    %477 = vmatprep.subr.mxu0 0.0
    %478 = vmatpush1.msra.mxu0 0.0
    %479 = vmatprep.subr.mxu0 0.0
    %480 = vmatpush1.msra.mxu0 0.0
    %481 = vmatprep.subr.mxu0 0.0
    %482 = vmatpush1.msra.mxu0 0.0
    %483 = vmatprep.subr.mxu0 0.0
    %484 = vmatpush1.msra.mxu0 0.0
    %485 = vmatprep.subr.mxu0 0.0
    %486 = vmatpush1.msra.mxu0 0.0
    %487 = vmatprep.subr.mxu0 0.0
    %488 = vmatpush1.msra.mxu0 0.0
    %489 = vmatprep.subr.mxu0 0.0
    %490 = vmatpush1.msra.mxu0 0.0
    %491 = vmatprep.subr.mxu0 0.0
    %492 = vmatpush1.msra.mxu0 0.0
    %493 = vmatprep.mubr.f32.mxu0 0.0
    %494 = vmatmul.mubr.f32.gmra.mrb[0].mxu0 %v356
    %v495 = vpop.f32.mrb[0].mxu0
    %v496 = vadd.f32 %v352, %v495
    %v497 = vpop.f32.mrb[0].mxu0
    %v498 = vadd.f32 %v352, %v497
    %499 = vdwg.mxu0
    %v500 = vmax.f32 %v425, 0.0
    %v501 = vmax.f32 %v427, 0.0
    %v502 = vmax.f32 %v496, 0.0
    %v503 = vmax.f32 %v498, 0.0
    %v504 = vld [vmem:[%s4] sm:$0xff]
    %505 = vrot.lane.b32.xlu0 %v500, 17
    %v506 = vpop.permute.xlu0 %505
    %507 = vrot.lane.b32.xlu0 %v501, 17
    %v508 = vpop.permute.xlu0 %507
    %509 = vrot.lane.b32.xlu0 %v502, 17
    %v510 = vpop.permute.xlu0 %509
    %511 = vrot.lane.b32.xlu0 %v503, 17
    %v512 = vpop.permute.xlu0 %511
    %v513 = vsel %vm92, %v510, %v512
    %v514 = vsel %vm92, %v508, %v510
    %v515 = vsel %vm92, %v506, %v508
    %v516 = vsel %vm92, %v512, %v506
    %v517 = vmul.f32 %v516, %v100
    %v518 = vmul.f32 %v515, %v104
    %v519 = vmul.f32 %v514, %v108
    %v520 = vmul.f32 %v513, %v112
    %521 = vrot.lane.b32.xlu0 %v500, 16
    %v522 = vpop.permute.xlu0 %521
    %523 = vrot.lane.b32.xlu0 %v501, 16
    %v524 = vpop.permute.xlu0 %523
    %525 = vrot.lane.b32.xlu0 %v502, 16
    %v526 = vpop.permute.xlu0 %525
    %527 = vrot.lane.b32.xlu0 %v503, 16
    %v528 = vpop.permute.xlu0 %527
    %v529 = vsel %vm125, %v526, %v528
    %v530 = vsel %vm125, %v524, %v526
    %v531 = vsel %vm125, %v522, %v524
    %v532 = vsel %vm125, %v528, %v522
    %v533 = vmul.f32 %v532, %v133
    %v534 = vmul.f32 %v531, %v137
    %v535 = vmul.f32 %v530, %v141
    %v536 = vmul.f32 %v529, %v145
    %537 = vrot.lane.b32.xlu0 %v500, 15
    %v538 = vpop.permute.xlu0 %537
    %539 = vrot.lane.b32.xlu0 %v501, 15
    %v540 = vpop.permute.xlu0 %539
    %541 = vrot.lane.b32.xlu0 %v502, 15
    %v542 = vpop.permute.xlu0 %541
    %543 = vrot.lane.b32.xlu0 %v503, 15
    %v544 = vpop.permute.xlu0 %543
    %v545 = vsel %vm158, %v542, %v544
    %v546 = vsel %vm158, %v540, %v542
    %v547 = vsel %vm158, %v538, %v540
    %v548 = vsel %vm158, %v544, %v538
    %v549 = vmul.f32 %v548, %v166
    %v550 = vmul.f32 %v547, %v170
    %v551 = vmul.f32 %v546, %v174
    %v552 = vmul.f32 %v545, %v178
    %553 = vrot.lane.b32.xlu0 %v500, 1
    %v554 = vpop.permute.xlu0 %553
    %555 = vrot.lane.b32.xlu0 %v501, 1
    %v556 = vpop.permute.xlu0 %555
    %557 = vrot.lane.b32.xlu0 %v502, 1
    %v558 = vpop.permute.xlu0 %557
    %559 = vrot.lane.b32.xlu0 %v503, 1
    %v560 = vpop.permute.xlu0 %559
    %v561 = vsel %vm191, %v558, %v560
    %v562 = vsel %vm191, %v556, %v558
    %v563 = vsel %vm191, %v554, %v556
    %v564 = vsel %vm191, %v560, %v554
    %v565 = vmul.f32 %v564, %v199
    %v566 = vmul.f32 %v563, %v203
    %v567 = vmul.f32 %v562, %v207
    %v568 = vmul.f32 %v561, %v211
    %569 = vrot.lane.b32.xlu0 %v500, 127
    %v570 = vpop.permute.xlu0 %569
    %571 = vrot.lane.b32.xlu0 %v501, 127
    %v572 = vpop.permute.xlu0 %571
    %573 = vrot.lane.b32.xlu0 %v502, 127
    %v574 = vpop.permute.xlu0 %573
    %575 = vrot.lane.b32.xlu0 %v503, 127
    %v576 = vpop.permute.xlu0 %575
    %v577 = vsel %vm224, %v574, %v576
    %v578 = vsel %vm224, %v572, %v574
    %v579 = vsel %vm224, %v570, %v572
    %v580 = vsel %vm224, %v576, %v570
    %v581 = vmul.f32 %v579, %v232
    %v582 = vmul.f32 %v578, %v236
    %v583 = vmul.f32 %v577, %v240
    %v584 = vmul.f32 %v580, %v244
    %585 = vrot.lane.b32.xlu0 %v500, 113
    %v586 = vpop.permute.xlu0 %585
    %587 = vrot.lane.b32.xlu0 %v501, 113
    %v588 = vpop.permute.xlu0 %587
    %589 = vrot.lane.b32.xlu0 %v502, 113
    %v590 = vpop.permute.xlu0 %589
    %591 = vrot.lane.b32.xlu0 %v503, 113
    %v592 = vpop.permute.xlu0 %591
    %v593 = vsel %vm257, %v590, %v592
    %v594 = vsel %vm257, %v588, %v590
    %v595 = vsel %vm257, %v586, %v588
    %v596 = vsel %vm257, %v592, %v586
    %v597 = vmul.f32 %v595, %v265
    %v598 = vmul.f32 %v594, %v269
    %v599 = vmul.f32 %v593, %v273
    %v600 = vmul.f32 %v596, %v277
    %601 = vrot.lane.b32.xlu0 %v500, 112
    %v602 = vpop.permute.xlu0 %601
    %603 = vrot.lane.b32.xlu0 %v501, 112
    %v604 = vpop.permute.xlu0 %603
    %605 = vrot.lane.b32.xlu0 %v502, 112
    %v606 = vpop.permute.xlu0 %605
    %607 = vrot.lane.b32.xlu0 %v503, 112
    %v608 = vpop.permute.xlu0 %607
    %v609 = vsel %vm290, %v606, %v608
    %v610 = vsel %vm290, %v604, %v606
    %v611 = vsel %vm290, %v602, %v604
    %v612 = vsel %vm290, %v608, %v602
    %v613 = vmul.f32 %v611, %v298
    %v614 = vmul.f32 %v610, %v302
    %v615 = vmul.f32 %v609, %v306
    %v616 = vmul.f32 %v612, %v310
    %617 = vrot.lane.b32.xlu0 %v500, 111
    %v618 = vpop.permute.xlu0 %617
    %619 = vrot.lane.b32.xlu0 %v501, 111
    %v620 = vpop.permute.xlu0 %619
    %621 = vrot.lane.b32.xlu0 %v502, 111
    %v622 = vpop.permute.xlu0 %621
    %623 = vrot.lane.b32.xlu0 %v503, 111
    %v624 = vpop.permute.xlu0 %623
    %v625 = vsel %vm323, %v622, %v624
    %v626 = vsel %vm323, %v620, %v622
    %v627 = vsel %vm323, %v618, %v620
    %v628 = vsel %vm323, %v624, %v618
    %v629 = vmul.f32 %v627, %v331
    %v630 = vmul.f32 %v626, %v335
    %v631 = vmul.f32 %v625, %v339
    %v632 = vmul.f32 %v628, %v343
    %v633 = vld [vmem:[%s5] sm:$0xff]
    %635 = vset.pattern.permute.xlu0 0
    %636 = vperm.xlu0 %635, %v633
    %v637 = vpop.permute.xlu0 %636
    %v640 = vsel %vm354, %v504, 0
    %642 = vmatprep.subr.mxu0 %v518
    %643 = vmatpush1.msra.mxu0 %v517
    %644 = vmatprep.subr.mxu0 %v534
    %645 = vmatpush1.msra.mxu0 %v533
    %646 = vmatprep.subr.mxu0 %v550
    %647 = vmatpush1.msra.mxu0 %v549
    %648 = vmatprep.subr.mxu0 %v566
    %649 = vmatpush1.msra.mxu0 %v565
    %650 = vmatprep.subr.mxu0 %v501
    %651 = vmatpush1.msra.mxu0 %v500
    %652 = vmatprep.subr.mxu0 %v582
    %653 = vmatpush1.msra.mxu0 %v581
    %654 = vmatprep.subr.mxu0 %v598
    %655 = vmatpush1.msra.mxu0 %v597
    %656 = vmatprep.subr.mxu0 %v614
    %657 = vmatpush1.msra.mxu0 %v613
    %658 = vmatprep.subr.mxu0 %v630
    %659 = vmatpush1.msra.mxu0 %v629
    %660 = vmatprep.subr.mxu0 0.0
    %661 = vmatpush1.msra.mxu0 0.0
    %662 = vmatprep.subr.mxu0 0.0
    %663 = vmatpush1.msra.mxu0 0.0
    %664 = vmatprep.subr.mxu0 0.0
    %665 = vmatpush1.msra.mxu0 0.0
    %666 = vmatprep.subr.mxu0 0.0
    %667 = vmatpush1.msra.mxu0 0.0
    %668 = vmatprep.subr.mxu0 0.0
    %669 = vmatpush1.msra.mxu0 0.0
    %670 = vmatprep.subr.mxu0 0.0
    %671 = vmatpush1.msra.mxu0 0.0
    %672 = vmatprep.subr.mxu0 0.0
    %673 = vmatpush1.msra.mxu0 0.0
    %674 = vmatprep.subr.mxu0 0.0
    %675 = vmatpush1.msra.mxu0 0.0
    %676 = vmatprep.subr.mxu0 0.0
    %677 = vmatpush1.msra.mxu0 0.0
    %678 = vmatprep.subr.mxu0 0.0
    %679 = vmatpush1.msra.mxu0 0.0
    %680 = vmatprep.subr.mxu0 0.0
    %681 = vmatpush1.msra.mxu0 0.0
    %682 = vmatprep.subr.mxu0 0.0
    %683 = vmatpush1.msra.mxu0 0.0
    %684 = vmatprep.subr.mxu0 0.0
    %685 = vmatpush1.msra.mxu0 0.0
    %686 = vmatprep.subr.mxu0 0.0
    %687 = vmatpush1.msra.mxu0 0.0
    %688 = vmatprep.subr.mxu0 0.0
    %689 = vmatpush1.msra.mxu0 0.0
    %690 = vmatprep.subr.mxu0 0.0
    %691 = vmatpush1.msra.mxu0 0.0
    %692 = vmatprep.subr.mxu0 0.0
    %693 = vmatpush1.msra.mxu0 0.0
    %694 = vmatprep.subr.mxu0 0.0
    %695 = vmatpush1.msra.mxu0 0.0
    %696 = vmatprep.subr.mxu0 0.0
    %697 = vmatpush1.msra.mxu0 0.0
    %698 = vmatprep.subr.mxu0 0.0
    %699 = vmatpush1.msra.mxu0 0.0
    %700 = vmatprep.subr.mxu0 0.0
    %701 = vmatpush1.msra.mxu0 0.0
    %702 = vmatprep.subr.mxu0 0.0
    %703 = vmatpush1.msra.mxu0 0.0
    %704 = vmatprep.subr.mxu0 0.0
    %705 = vmatpush1.msra.mxu0 0.0
    %706 = vmatprep.mubr.f32.mxu0 0.0
    %707 = vmatmul.mubr.f32.gmra.mrb[0].mxu0 %v640
    %v708 = vpop.f32.mrb[0].mxu0
    %v709 = vadd.f32 %v637, %v708
    %v710 = vpop.f32.mrb[0].mxu0
    %v711 = vadd.f32 %v637, %v710
    %712 = vdwg.mxu0
    %713 = vmatprep.subr.mxu0 %v520
    %714 = vmatpush1.msra.mxu0 %v519
    %715 = vmatprep.subr.mxu0 %v536
    %716 = vmatpush1.msra.mxu0 %v535
    %717 = vmatprep.subr.mxu0 %v552
    %718 = vmatpush1.msra.mxu0 %v551
    %719 = vmatprep.subr.mxu0 %v568
    %720 = vmatpush1.msra.mxu0 %v567
    %721 = vmatprep.subr.mxu0 %v503
    %722 = vmatpush1.msra.mxu0 %v502
    %723 = vmatprep.subr.mxu0 %v584
    %724 = vmatpush1.msra.mxu0 %v583
    %725 = vmatprep.subr.mxu0 %v600
    %726 = vmatpush1.msra.mxu0 %v599
    %727 = vmatprep.subr.mxu0 %v616
    %728 = vmatpush1.msra.mxu0 %v615
    %729 = vmatprep.subr.mxu0 %v632
    %730 = vmatpush1.msra.mxu0 %v631
    %731 = vmatprep.subr.mxu0 0.0
    %732 = vmatpush1.msra.mxu0 0.0
    %733 = vmatprep.subr.mxu0 0.0
    %734 = vmatpush1.msra.mxu0 0.0
    %735 = vmatprep.subr.mxu0 0.0
    %736 = vmatpush1.msra.mxu0 0.0
    %737 = vmatprep.subr.mxu0 0.0
    %738 = vmatpush1.msra.mxu0 0.0
    %739 = vmatprep.subr.mxu0 0.0
    %740 = vmatpush1.msra.mxu0 0.0
    %741 = vmatprep.subr.mxu0 0.0
    %742 = vmatpush1.msra.mxu0 0.0
    %743 = vmatprep.subr.mxu0 0.0
    %744 = vmatpush1.msra.mxu0 0.0
    %745 = vmatprep.subr.mxu0 0.0
    %746 = vmatpush1.msra.mxu0 0.0
    %747 = vmatprep.subr.mxu0 0.0
    %748 = vmatpush1.msra.mxu0 0.0
    %749 = vmatprep.subr.mxu0 0.0
    %750 = vmatpush1.msra.mxu0 0.0
    %751 = vmatprep.subr.mxu0 0.0
    %752 = vmatpush1.msra.mxu0 0.0
    %753 = vmatprep.subr.mxu0 0.0
    %754 = vmatpush1.msra.mxu0 0.0
    %755 = vmatprep.subr.mxu0 0.0
    %756 = vmatpush1.msra.mxu0 0.0
    %757 = vmatprep.subr.mxu0 0.0
    %758 = vmatpush1.msra.mxu0 0.0
    %759 = vmatprep.subr.mxu0 0.0
    %760 = vmatpush1.msra.mxu0 0.0
    %761 = vmatprep.subr.mxu0 0.0
    %762 = vmatpush1.msra.mxu0 0.0
    %763 = vmatprep.subr.mxu0 0.0
    %764 = vmatpush1.msra.mxu0 0.0
    %765 = vmatprep.subr.mxu0 0.0
    %766 = vmatpush1.msra.mxu0 0.0
    %767 = vmatprep.subr.mxu0 0.0
    %768 = vmatpush1.msra.mxu0 0.0
    %769 = vmatprep.subr.mxu0 0.0
    %770 = vmatpush1.msra.mxu0 0.0
    %771 = vmatprep.subr.mxu0 0.0
    %772 = vmatpush1.msra.mxu0 0.0
    %773 = vmatprep.subr.mxu0 0.0
    %774 = vmatpush1.msra.mxu0 0.0
    %775 = vmatprep.subr.mxu0 0.0
    %776 = vmatpush1.msra.mxu0 0.0
    %777 = vmatprep.mubr.f32.mxu0 0.0
    %778 = vmatmul.mubr.f32.gmra.mrb[0].mxu0 %v640
    %v779 = vpop.f32.mrb[0].mxu0
    %v780 = vadd.f32 %v637, %v779
    %v781 = vpop.f32.mrb[0].mxu0
    %v782 = vadd.f32 %v637, %v781
    %783 = vdwg.mxu0
    %v784 = vmax.f32 %v709, 0.0
    %v785 = vmax.f32 %v711, 0.0
    %v786 = vmax.f32 %v780, 0.0
    %v787 = vmax.f32 %v782, 0.0
    %788 = vst [vmem:[#allocation9] sm:$0xff] %v784
    %789 = vst [vmem:[#allocation9 + $0x8] sm:$0xff] %v785
    %790 = vst [vmem:[#allocation9 + $0x10] sm:$0xff] %v786
    %791 = vst [vmem:[#allocation9 + $0x18] sm:$0xff] %v787
    %792 = vrot.lane.b32.xlu0 %v784, 127
    %v793 = vpop.permute.xlu0 %792
    %794 = vrot.lane.b32.xlu0 %v785, 127
    %v795 = vpop.permute.xlu0 %794
    %796 = vrot.lane.b32.xlu0 %v786, 127
    %v797 = vpop.permute.xlu0 %796
    %798 = vrot.lane.b32.xlu0 %v787, 127
    %v799 = vpop.permute.xlu0 %798
    %v800 = vsel %vm224, %v797, %v799
    %v801 = vsel %vm224, %v795, %v797
    %v802 = vsel %vm224, %v793, %v795
    %v803 = vsel %vm224, %v799, %v793
    %v804 = vmax.f32 %v784, %v802
    %v805 = vmax.f32 %v785, %v801
    %v806 = vmax.f32 %v786, %v800
    %v807 = vmax.f32 %v787, %v803
    %808 = vrot.lane.b32.xlu0 %v804, 112
    %v809 = vpop.permute.xlu0 %808
    %810 = vrot.lane.b32.xlu0 %v805, 112
    %v811 = vpop.permute.xlu0 %810
    %812 = vrot.lane.b32.xlu0 %v806, 112
    %v813 = vpop.permute.xlu0 %812
    %814 = vrot.lane.b32.xlu0 %v807, 112
    %v815 = vpop.permute.xlu0 %814
    %v816 = vsel %vm290, %v813, %v815
    %v817 = vsel %vm290, %v811, %v813
    %v818 = vsel %vm290, %v809, %v811
    %v819 = vsel %vm290, %v815, %v809
    %v820 = vmax.f32 %v804, %v818
    %v821 = vmax.f32 %v805, %v817
    %v822 = vmax.f32 %v806, %v816
    %v823 = vmax.f32 %v807, %v819
    %v824 = vld [vmem:[#allocation7] sm:$0xff]
    %v825 = vld [vmem:[#allocation7 + $0x8] sm:$0xff]
    %v826 = vld [vmem:[#allocation7 + $0x10] sm:$0xff]
    %v827 = vld [vmem:[#allocation7 + $0x18] sm:$0xff]
    %v828 = vld [vmem:[#allocation7 + $0x20] sm:$0xff]
    %v829 = vld [vmem:[#allocation7 + $0x28] sm:$0xff]
    %v830 = vld [vmem:[#allocation7 + $0x30] sm:$0xff]
    %v831 = vld [vmem:[#allocation7 + $0x38] sm:$0xff]
    %v832 = vld [vmem:[#allocation7 + $0x40] sm:$0xff]
    %v833 = vld [vmem:[#allocation7 + $0x48] sm:$0xff]
    %v834 = vld [vmem:[#allocation7 + $0x50] sm:$0xff]
    %v835 = vld [vmem:[#allocation7 + $0x58] sm:$0xff]
    %v836 = vld [vmem:[#allocation7 + $0x60] sm:$0xff]
    %v837 = vld [vmem:[#allocation7 + $0x68] sm:$0xff]
    %v838 = vld [vmem:[#allocation7 + $0x70] sm:$0xff]
    %v839 = vld [vmem:[#allocation7 + $0x78] sm:$0xff]
    %v840 = vld [vmem:[#allocation7 + $0x80] sm:$0xff]
    %v841 = vld [vmem:[#allocation7 + $0x88] sm:$0xff]
    %v842 = vld [vmem:[#allocation7 + $0x90] sm:$0xff]
    %v843 = vld [vmem:[#allocation7 + $0x98] sm:$0xff]
    %v844 = vld [vmem:[#allocation7 + $0xa0] sm:$0xff]
    %v845 = vld [vmem:[#allocation7 + $0xa8] sm:$0xff]
    %v846 = vld [vmem:[#allocation7 + $0xb0] sm:$0xff]
    %v847 = vld [vmem:[#allocation7 + $0xb8] sm:$0xff]
    %v848 = vld [vmem:[#allocation7 + $0xc0] sm:$0xff]
    %v849 = vld [vmem:[#allocation7 + $0xc8] sm:$0xff]
    %v850 = vld [vmem:[#allocation7 + $0xd0] sm:$0xff]
    %v851 = vld [vmem:[#allocation7 + $0xd8] sm:$0xff]
    %v852 = vld [vmem:[#allocation7 + $0xe0] sm:$0xff]
    %v853 = vld [vmem:[#allocation7 + $0xe8] sm:$0xff]
    %v854 = vld [vmem:[#allocation7 + $0xf0] sm:$0xff]
    %v855 = vld [vmem:[#allocation7 + $0xf8] sm:$0xff]
    %v856 = vld [vmem:[#allocation7 + $0x100] sm:$0xff]
    %v857 = vld [vmem:[#allocation7 + $0x108] sm:$0xff]
    %v858 = vld [vmem:[#allocation7 + $0x110] sm:$0xff]
    %v859 = vld [vmem:[#allocation7 + $0x118] sm:$0xff]
    %v860 = vld [vmem:[#allocation7 + $0x120] sm:$0xff]
    %v861 = vld [vmem:[#allocation7 + $0x128] sm:$0xff]
    %v862 = vld [vmem:[#allocation7 + $0x130] sm:$0xff]
    %v863 = vld [vmem:[#allocation7 + $0x138] sm:$0xff]
    %v864 = vld [vmem:[#allocation7 + $0x140] sm:$0xff]
    %v865 = vld [vmem:[#allocation7 + $0x148] sm:$0xff]
    %v866 = vld [vmem:[#allocation7 + $0x150] sm:$0xff]
    %v867 = vld [vmem:[#allocation7 + $0x158] sm:$0xff]
    %v868 = vld [vmem:[#allocation7 + $0x160] sm:$0xff]
    %v869 = vld [vmem:[#allocation7 + $0x168] sm:$0xff]
    %v870 = vld [vmem:[#allocation7 + $0x170] sm:$0xff]
    %v871 = vld [vmem:[#allocation7 + $0x178] sm:$0xff]
    %v872 = vld [vmem:[#allocation7 + $0x180] sm:$0xff]
    %v873 = vld [vmem:[#allocation7 + $0x188] sm:$0xff]
    %v874 = vld [vmem:[#allocation7 + $0x190] sm:$0xff]
    %v875 = vld [vmem:[#allocation7 + $0x198] sm:$0xff]
    %v876 = vld [vmem:[#allocation7 + $0x1a0] sm:$0xff]
    %v877 = vld [vmem:[#allocation7 + $0x1a8] sm:$0xff]
    %v878 = vld [vmem:[#allocation7 + $0x1b0] sm:$0xff]
    %v879 = vld [vmem:[#allocation7 + $0x1b8] sm:$0xff]
    %v880 = vld [vmem:[#allocation7 + $0x1c0] sm:$0xff]
    %v881 = vld [vmem:[#allocation7 + $0x1c8] sm:$0xff]
    %v882 = vld [vmem:[#allocation7 + $0x1d0] sm:$0xff]
    %v883 = vld [vmem:[#allocation7 + $0x1d8] sm:$0xff]
    %v884 = vld [vmem:[#allocation7 + $0x1e0] sm:$0xff]
    %v885 = vld [vmem:[#allocation7 + $0x1e8] sm:$0xff]
    %v886 = vld [vmem:[#allocation7 + $0x1f0] sm:$0xff]
    %v887 = vld [vmem:[#allocation7 + $0x1f8] sm:$0xff]
    %888 = vmatprep.subr.mxu0 0.0
    %889 = vmatpush1.msra.mxu0 %v824
    %890 = vmatprep.subr.mxu0 0.0
    %891 = vmatpush1.msra.mxu0 %v825
    %892 = vmatprep.subr.mxu0 0.0
    %893 = vmatpush1.msra.mxu0 %v826
    %894 = vmatprep.subr.mxu0 0.0
    %895 = vmatpush1.msra.mxu0 %v827
    %896 = vmatprep.subr.mxu0 0.0
    %897 = vmatpush1.msra.mxu0 %v828
    %898 = vmatprep.subr.mxu0 0.0
    %899 = vmatpush1.msra.mxu0 %v829
    %900 = vmatprep.subr.mxu0 0.0
    %901 = vmatpush1.msra.mxu0 %v830
    %902 = vmatprep.subr.mxu0 0.0
    %903 = vmatpush1.msra.mxu0 %v831
    %904 = vmatprep.subr.mxu0 0.0
    %905 = vmatpush1.msra.mxu0 %v832
    %906 = vmatprep.subr.mxu0 0.0
    %907 = vmatpush1.msra.mxu0 %v833
    %908 = vmatprep.subr.mxu0 0.0
    %909 = vmatpush1.msra.mxu0 %v834
    %910 = vmatprep.subr.mxu0 0.0
    %911 = vmatpush1.msra.mxu0 %v835
    %912 = vmatprep.subr.mxu0 0.0
    %913 = vmatpush1.msra.mxu0 %v836
    %914 = vmatprep.subr.mxu0 0.0
    %915 = vmatpush1.msra.mxu0 %v837
    %916 = vmatprep.subr.mxu0 0.0
    %917 = vmatpush1.msra.mxu0 %v838
    %918 = vmatprep.subr.mxu0 0.0
    %919 = vmatpush1.msra.mxu0 %v839
    %920 = vmatprep.subr.mxu0 0.0
    %921 = vmatpush1.msra.mxu0 %v840
    %922 = vmatprep.subr.mxu0 0.0
    %923 = vmatpush1.msra.mxu0 %v841
    %924 = vmatprep.subr.mxu0 0.0
    %925 = vmatpush1.msra.mxu0 %v842
    %926 = vmatprep.subr.mxu0 0.0
    %927 = vmatpush1.msra.mxu0 %v843
    %928 = vmatprep.subr.mxu0 0.0
    %929 = vmatpush1.msra.mxu0 %v844
    %930 = vmatprep.subr.mxu0 0.0
    %931 = vmatpush1.msra.mxu0 %v845
    %932 = vmatprep.subr.mxu0 0.0
    %933 = vmatpush1.msra.mxu0 %v846
    %934 = vmatprep.subr.mxu0 0.0
    %935 = vmatpush1.msra.mxu0 %v847
    %936 = vmatprep.subr.mxu0 0.0
    %937 = vmatpush1.msra.mxu0 %v848
    %938 = vmatprep.subr.mxu0 0.0
    %939 = vmatpush1.msra.mxu0 %v849
    %940 = vmatprep.subr.mxu0 0.0
    %941 = vmatpush1.msra.mxu0 %v850
    %942 = vmatprep.subr.mxu0 0.0
    %943 = vmatpush1.msra.mxu0 %v851
    %944 = vmatprep.subr.mxu0 0.0
    %945 = vmatpush1.msra.mxu0 %v852
    %946 = vmatprep.subr.mxu0 0.0
    %947 = vmatpush1.msra.mxu0 %v853
    %948 = vmatprep.subr.mxu0 0.0
    %949 = vmatpush1.msra.mxu0 %v854
    %950 = vmatprep.subr.mxu0 0.0
    %951 = vmatpush1.msra.mxu0 %v855
    %952 = vmatprep.mubr.f32.mxu0 %v821
    %953 = vmatmul.mubr.f32.gmra.mrb[0].mxu0 %v820
    %v954 = vpop.f32.mrb[0].mxu0
    %v955 = vadd.f32 0.0, %v954
    %v956 = vpop.f32.mrb[0].mxu0
    %957 = vdwg.mxu0
    %958 = vmatprep.subr.mxu0 0.0
    %959 = vmatpush1.msra.mxu0 %v856
    %960 = vmatprep.subr.mxu0 0.0
    %961 = vmatpush1.msra.mxu0 %v857
    %962 = vmatprep.subr.mxu0 0.0
    %963 = vmatpush1.msra.mxu0 %v858
    %964 = vmatprep.subr.mxu0 0.0
    %965 = vmatpush1.msra.mxu0 %v859
    %966 = vmatprep.subr.mxu0 0.0
    %967 = vmatpush1.msra.mxu0 %v860
    %968 = vmatprep.subr.mxu0 0.0
    %969 = vmatpush1.msra.mxu0 %v861
    %970 = vmatprep.subr.mxu0 0.0
    %971 = vmatpush1.msra.mxu0 %v862
    %972 = vmatprep.subr.mxu0 0.0
    %973 = vmatpush1.msra.mxu0 %v863
    %974 = vmatprep.subr.mxu0 0.0
    %975 = vmatpush1.msra.mxu0 %v864
    %976 = vmatprep.subr.mxu0 0.0
    %977 = vmatpush1.msra.mxu0 %v865
    %978 = vmatprep.subr.mxu0 0.0
    %979 = vmatpush1.msra.mxu0 %v866
    %980 = vmatprep.subr.mxu0 0.0
    %981 = vmatpush1.msra.mxu0 %v867
    %982 = vmatprep.subr.mxu0 0.0
    %983 = vmatpush1.msra.mxu0 %v868
    %984 = vmatprep.subr.mxu0 0.0
    %985 = vmatpush1.msra.mxu0 %v869
    %986 = vmatprep.subr.mxu0 0.0
    %987 = vmatpush1.msra.mxu0 %v870
    %988 = vmatprep.subr.mxu0 0.0
    %989 = vmatpush1.msra.mxu0 %v871
    %990 = vmatprep.subr.mxu0 0.0
    %991 = vmatpush1.msra.mxu0 %v872
    %992 = vmatprep.subr.mxu0 0.0
    %993 = vmatpush1.msra.mxu0 %v873
    %994 = vmatprep.subr.mxu0 0.0
    %995 = vmatpush1.msra.mxu0 %v874
    %996 = vmatprep.subr.mxu0 0.0
    %997 = vmatpush1.msra.mxu0 %v875
    %998 = vmatprep.subr.mxu0 0.0
    %999 = vmatpush1.msra.mxu0 %v876
    %1000 = vmatprep.subr.mxu0 0.0
    %1001 = vmatpush1.msra.mxu0 %v877
    %1002 = vmatprep.subr.mxu0 0.0
    %1003 = vmatpush1.msra.mxu0 %v878
    %1004 = vmatprep.subr.mxu0 0.0
    %1005 = vmatpush1.msra.mxu0 %v879
    %1006 = vmatprep.subr.mxu0 0.0
    %1007 = vmatpush1.msra.mxu0 %v880
    %1008 = vmatprep.subr.mxu0 0.0
    %1009 = vmatpush1.msra.mxu0 %v881
    %1010 = vmatprep.subr.mxu0 0.0
    %1011 = vmatpush1.msra.mxu0 %v882
    %1012 = vmatprep.subr.mxu0 0.0
    %1013 = vmatpush1.msra.mxu0 %v883
    %1014 = vmatprep.subr.mxu0 0.0
    %1015 = vmatpush1.msra.mxu0 %v884
    %1016 = vmatprep.subr.mxu0 0.0
    %1017 = vmatpush1.msra.mxu0 %v885
    %1018 = vmatprep.subr.mxu0 0.0
    %1019 = vmatpush1.msra.mxu0 %v886
    %1020 = vmatprep.subr.mxu0 0.0
    %1021 = vmatpush1.msra.mxu0 %v887
    %1022 = vmatprep.mubr.f32.mxu0 %v823
    %1023 = vmatmul.mubr.f32.gmra.mrb[0].mxu0 %v822
    %v1024 = vpop.f32.mrb[0].mxu0
    %v1025 = vadd.f32 %v955, %v1024
    %v1026 = vpop.f32.mrb[0].mxu0
    %1027 = vdwg.mxu0
    %1028 = vst [vmem:[#allocation8] sm:$0xff] %v1025
    // Predicated region
    $region42: #{tpu_custom_call.1} parent=1 // pred_check
      _
    $region43: #{tpu_custom_call.1} parent=1 // pred_check_branch
      %1030 = sbr.rel (0) target = $region45
    $region44: #{tpu_custom_call.1} parent=1 // pred_region
      %s1032 = ssub.s32 128, 128
      %1033 = vsyncadd [#allocation4], %s1032
      %s1035 = sshll.u32 [#allocation8], 4
      %s1036 = int_to_ptr.vmem [resolvable:$true] %s1035
      %1038 = dma.vmem_to_hbm [thread:$0]  %s1036, 128, %s7, [#allocation4]
    $region45: #{tpu_custom_call.1} parent=1 // pred_fallthru
      _
    // Predicated region
    $region46: #{tpu_custom_call.1} parent=1 // pred_check
      _
    $region47: #{tpu_custom_call.1} parent=1 // pred_check_branch
      %1040 = sbr.rel (0) target = $region49
    $region48: #{tpu_custom_call.1} parent=1 // pred_region
      %s1042 = ssub.s32 512, 512
      %1043 = vsyncadd [#allocation10], %s1042
      %s1045 = sshll.u32 [#allocation9], 4
      %s1046 = int_to_ptr.vmem [resolvable:$true] %s1045
      %1048 = dma.vmem_to_hbm [thread:$0]  %s1046, 512, %s8, [#allocation10]
    $region49: #{tpu_custom_call.1} parent=1 // pred_fallthru
      _
    // Predicated region
    $region50: #{tpu_custom_call.1} parent=1 // pred_check
      _
    $region51: #{tpu_custom_call.1} parent=1 // pred_check_branch
      %1050 = sbr.rel (0) target = $region53
    $region52: #{tpu_custom_call.1} parent=1 // pred_region
      %1051 = dma.done [#allocation4], 128
    $region53: #{tpu_custom_call.1} parent=1 // pred_fallthru
      _
    // Predicated region
    $region54: #{tpu_custom_call.1} parent=1 // pred_check
      _
    $region55: #{tpu_custom_call.1} parent=1 // pred_check_branch
      %1053 = sbr.rel (0) target = $region57
    $region56: #{tpu_custom_call.1} parent=1 // pred_region
      %1054 = dma.done [#allocation10], 512
    $region57: #{tpu_custom_call.1} parent=1 // pred_fallthru
      _
    %1055 = vsyncpa [#allocation3], 1
    %1056 = vsyncpa [#allocation6], 1
    %1057 = vsyncpa [#allocation4], 1
    %1058 = vsyncpa [#allocation10], 1

</llo_original>
